<compile_context>
chip_gen: v7x
topology: tpu7x:2x2x1
jax: 0.10.0
libtpu: 0.0.40
codegen_flags: <defaults>
</compile_context>

<pallas_src>
import jax
import jax.numpy as jnp
from jax import lax
from jax.experimental import pallas as pl
from jax.experimental.pallas import tpu as pltpu


def qnet_kernel(x_ref, w1_ref, b1_ref, w2_ref, b2_ref, w3t_ref, b3t_ref, ot_ref):
    # fc1 + relu: (TB, 18)bf16 @ (18, 128)bf16 -> (TB, 128)f32
    h1 = jnp.dot(x_ref[...], w1_ref[...], preferred_element_type=jnp.float32)
    h1 = jnp.maximum(h1 + b1_ref[...], 0.0)
    # fc2 + relu: bf16 operands, f32 accumulation
    h2 = jnp.dot(h1.astype(jnp.bfloat16), w2_ref[...],
                 preferred_element_type=jnp.float32)
    h2 = jnp.maximum(h2 + b2_ref[...], 0.0)
    # fc3, computed transposed for a lane-dense (2, TB) output store:
    #   out_t = W3^T @ h2^T  (rhs-transposed dot_general, MXU-native pattern)
    out_t = lax.dot_general(
        w3t_ref[...], h2.astype(jnp.bfloat16),
        dimension_numbers=(((1,), (1,)), ((), ())),
        preferred_element_type=jnp.float32)
    ot_ref[...] = (out_t + b3t_ref[...]).astype(ot_ref.dtype)


def _round_up(n, m):
    return ((n + m - 1) // m) * m


def qnet_forward(x, params, *, tb_max=512):
    """x: (B, 18) f32; returns (B, 2) f32 Q-values."""
    w1, b1, w2, b2, w3, b3 = params
    batch, feat = x.shape
    n_out = w3.shape[1]

    # bf16 matmul operands (accumulation stays f32 inside the kernel).
    xb = x.astype(jnp.bfloat16)
    w1b = w1.astype(jnp.bfloat16)
    w2b = w2.astype(jnp.bfloat16)
    w3t = w3.T.astype(jnp.bfloat16)        # (2, 128): weights for lane-dense fc3
    b3t = b3.reshape(n_out, 1)             # (2, 1) column bias for (2, TB) output

    # Batch tile: multiple of 128 so the transposed (2, TB) output block is a
    # full-lane store; capped by tb_max to bound VMEM (footprint << 32 MiB on
    # every generation, including v7x's 64 MiB VMEM).
    tb = min(tb_max, _round_up(batch, 128))
    b_pad = _round_up(batch, tb)
    if b_pad != batch:
        xb = jnp.pad(xb, ((0, b_pad - batch), (0, 0)))

    out_t = pl.pallas_call(
        qnet_kernel,
        out_shape=jax.ShapeDtypeStruct((n_out, b_pad), jnp.float32),
        grid=(b_pad // tb,),
        in_specs=[
            # x streamed per batch tile; feature axis kept whole (contiguous DMA)
            pl.BlockSpec((tb, feat), lambda i: (i, 0)),
            # weights / biases: constant index_map -> VMEM-resident across grid
            pl.BlockSpec(w1b.shape, lambda i: (0, 0)),
            pl.BlockSpec(b1.shape, lambda i: (0, 0)),
            pl.BlockSpec(w2b.shape, lambda i: (0, 0)),
            pl.BlockSpec(b2.shape, lambda i: (0, 0)),
            pl.BlockSpec(w3t.shape, lambda i: (0, 0)),
            pl.BlockSpec(b3t.shape, lambda i: (0, 0)),
        ],
        out_specs=pl.BlockSpec((n_out, tb), lambda i: (0, i)),
        compiler_params=pltpu.CompilerParams(
            dimension_semantics=("parallel",),      # megacore split on v7x
            vmem_limit_bytes=32 * 1024 * 1024,
        ),
    )(xb, w1b, b1, w2b, b2, w3t, b3t)

    return out_t.T[:batch]


def init_params(key):
    """Deterministic init mimicking PyTorch nn.Linear's U(-1/sqrt(fan_in), +)."""
    dims = [(18, 128), (128, 128), (128, 2)]
    params = []
    for i, (fan_in, fan_out) in enumerate(dims):
        kw, kb = jax.random.split(jax.random.fold_in(key, i))
        bound = 1.0 / jnp.sqrt(jnp.float32(fan_in))
        w = jax.random.uniform(kw, (fan_in, fan_out), jnp.float32, -bound, bound)
        b = jax.random.uniform(kb, (1, fan_out), jnp.float32, -bound, bound)
        params.extend([w, b])
    return tuple(params)


def reference_forward_bf16(x, params):
    """Reference with the same bf16-operand / f32-accumulate recipe as the kernel."""
    w1, b1, w2, b2, w3, b3 = params
    h1 = jnp.dot(x.astype(jnp.bfloat16), w1.astype(jnp.bfloat16),
                 preferred_element_type=jnp.float32)
    h1 = jnp.maximum(h1 + b1, 0.0)
    h2 = jnp.dot(h1.astype(jnp.bfloat16), w2.astype(jnp.bfloat16),
                 preferred_element_type=jnp.float32)
    h2 = jnp.maximum(h2 + b2, 0.0)
    return jnp.dot(h2.astype(jnp.bfloat16), w3.astype(jnp.bfloat16),
                   preferred_element_type=jnp.float32) + b3


def reference_forward_f32(x, params):
    w1, b1, w2, b2, w3, b3 = params
    h1 = jnp.maximum(x @ w1 + b1, 0.0)
    h2 = jnp.maximum(h1 @ w2 + b2, 0.0)
    return h2 @ w3 + b3


if __name__ == "__main__":
    key = jax.random.PRNGKey(0)
    k_params, k_x = jax.random.split(key)
    params = init_params(k_params)

    # Small RL-style batch (launch-overhead dominated at this size; kernel
    # tiling pays off only for larger batches).
    batch = 8
    x = jax.random.normal(k_x, (batch, 18), dtype=jnp.float32)
    out = jax.block_until_ready(qnet_forward(x, params))
    assert out.shape == (batch, 2)
    ref = reference_forward_bf16(x, params)
    assert jnp.allclose(out, ref, atol=1e-3, rtol=1e-3), "mismatch vs bf16 reference"
    ref32 = reference_forward_f32(x, params)
    assert jnp.allclose(out, ref32, atol=5e-2, rtol=0.0), "mismatch vs f32 reference"

    # Larger, non-tile-aligned batch: exercises padding + multi-step grid.
    x_big = jax.random.normal(jax.random.fold_in(k_x, 1), (600, 18), dtype=jnp.float32)
    out_big = jax.block_until_ready(qnet_forward(x_big, params))
    assert out_big.shape == (600, 2)
    ref_big = reference_forward_bf16(x_big, params)
    assert jnp.allclose(out_big, ref_big, atol=1e-3, rtol=1e-3), "mismatch (big batch)"

    print("KERNEL_OK")
</pallas_src>

<mosaic_0001>
module attributes {stable_mosaic.version = 11 : i64} {
  func.func @qnet_kernel(%arg0: i32, %arg1: memref<128x18xbf16, #tpu.memory_space<vmem>>, %arg2: memref<18x128xbf16, #tpu.memory_space<vmem>>, %arg3: memref<1x128xf32, #tpu.memory_space<vmem>>, %arg4: memref<128x128xbf16, #tpu.memory_space<vmem>>, %arg5: memref<1x128xf32, #tpu.memory_space<vmem>>, %arg6: memref<2x128xbf16, #tpu.memory_space<vmem>>, %arg7: memref<2x1xf32, #tpu.memory_space<vmem>>, %arg8: memref<2x128xf32, #tpu.memory_space<vmem>>) attributes {dimension_semantics = [#tpu.dimension_semantics<parallel>], iteration_bounds = array<i64: 1>, scalar_prefetch = 0 : i64, scratch_operands = 0 : i64, tpu.core_type = #tpu.core_type<tc>, window_params = [{transform_indices = @transform_0, window_bounds = array<i64: 128, 18>}, {pipeline_mode = #tpu.pipeline_mode<synchronous>, transform_indices = @transform_1, window_bounds = array<i64: 18, 128>}, {pipeline_mode = #tpu.pipeline_mode<synchronous>, transform_indices = @transform_2, window_bounds = array<i64: 1, 128>}, {pipeline_mode = #tpu.pipeline_mode<synchronous>, transform_indices = @transform_3, window_bounds = array<i64: 128, 128>}, {pipeline_mode = #tpu.pipeline_mode<synchronous>, transform_indices = @transform_4, window_bounds = array<i64: 1, 128>}, {pipeline_mode = #tpu.pipeline_mode<synchronous>, transform_indices = @transform_5, window_bounds = array<i64: 2, 128>}, {pipeline_mode = #tpu.pipeline_mode<synchronous>, transform_indices = @transform_6, window_bounds = array<i64: 2, 1>}, {transform_indices = @transform_7, window_bounds = array<i64: 2, 128>}]} {
    %c0 = arith.constant 0 : index
    %c0_0 = arith.constant 0 : index
    %0 = vector.load %arg1[%c0, %c0_0] : memref<128x18xbf16, #tpu.memory_space<vmem>>, vector<128x18xbf16>
    %c0_1 = arith.constant 0 : index
    %c0_2 = arith.constant 0 : index
    %1 = vector.load %arg2[%c0_1, %c0_2] : memref<18x128xbf16, #tpu.memory_space<vmem>>, vector<18x128xbf16>
    %cst = arith.constant dense<0.000000e+00> : vector<128x128xf32>
    %2 = tpu.matmul %0, %1, %cst {dimension_numbers = #tpu.dot_dimension_numbers<[1], [0], [0], [1], [0, 0, 1, 1], [], []>} : vector<128x18xbf16>, vector<18x128xbf16>, vector<128x128xf32> -> vector<128x128xf32>
    %c0_3 = arith.constant 0 : index
    %c0_4 = arith.constant 0 : index
    %3 = vector.load %arg3[%c0_3, %c0_4] : memref<1x128xf32, #tpu.memory_space<vmem>>, vector<1x128xf32>
    %4 = vector.broadcast %3 : vector<1x128xf32> to vector<128x128xf32>
    %5 = arith.addf %2, %4 : vector<128x128xf32>
    %cst_5 = arith.constant 0.000000e+00 : f32
    %6 = vector.broadcast %cst_5 : f32 to vector<128x128xf32>
    %7 = arith.maximumf %5, %6 : vector<128x128xf32>
    %8 = arith.truncf %7 : vector<128x128xf32> to vector<128x128xbf16>
    %c0_6 = arith.constant 0 : index
    %c0_7 = arith.constant 0 : index
    %9 = vector.load %arg4[%c0_6, %c0_7] : memref<128x128xbf16, #tpu.memory_space<vmem>>, vector<128x128xbf16>
    %cst_8 = arith.constant dense<0.000000e+00> : vector<128x128xf32>
    %10 = tpu.matmul %8, %9, %cst_8 {dimension_numbers = #tpu.dot_dimension_numbers<[1], [0], [0], [1], [0, 0, 1, 1], [], []>} : vector<128x128xbf16>, vector<128x128xbf16>, vector<128x128xf32> -> vector<128x128xf32>
    %c0_9 = arith.constant 0 : index
    %c0_10 = arith.constant 0 : index
    %11 = vector.load %arg5[%c0_9, %c0_10] : memref<1x128xf32, #tpu.memory_space<vmem>>, vector<1x128xf32>
    %12 = vector.broadcast %11 : vector<1x128xf32> to vector<128x128xf32>
    %13 = arith.addf %10, %12 : vector<128x128xf32>
    %cst_11 = arith.constant 0.000000e+00 : f32
    %14 = vector.broadcast %cst_11 : f32 to vector<128x128xf32>
    %15 = arith.maximumf %13, %14 : vector<128x128xf32>
    %c0_12 = arith.constant 0 : index
    %c0_13 = arith.constant 0 : index
    %16 = vector.load %arg6[%c0_12, %c0_13] : memref<2x128xbf16, #tpu.memory_space<vmem>>, vector<2x128xbf16>
    %17 = arith.truncf %15 : vector<128x128xf32> to vector<128x128xbf16>
    %cst_14 = arith.constant dense<0.000000e+00> : vector<2x128xf32>
    %18 = tpu.matmul %16, %17, %cst_14 {dimension_numbers = #tpu.dot_dimension_numbers<[1], [1], [0], [0], [0, 0, 1, 0], [], []>} : vector<2x128xbf16>, vector<128x128xbf16>, vector<2x128xf32> -> vector<2x128xf32>
    %c0_15 = arith.constant 0 : index
    %c0_16 = arith.constant 0 : index
    %19 = vector.load %arg7[%c0_15, %c0_16] : memref<2x1xf32, #tpu.memory_space<vmem>>, vector<2x1xf32>
    %20 = vector.broadcast %19 : vector<2x1xf32> to vector<2x128xf32>
    %21 = arith.addf %18, %20 : vector<2x128xf32>
    %c0_17 = arith.constant 0 : index
    %c0_18 = arith.constant 0 : index
    %22 = vector.load %arg8[%c0_17, %c0_18] : memref<2x128xf32, #tpu.memory_space<vmem>>, vector<2x128xf32>
    tpu.vector_store %arg8[%c0_17, %c0_18], %21 {strides = array<i32>} : memref<2x128xf32, #tpu.memory_space<vmem>>, vector<2x128xf32>,
    return
  }
  func.func @transform_0(%arg0: i32) -> (i32, i32) {
    %c0_i32 = arith.constant 0 : i32
    %c0_i32_0 = arith.constant 0 : i32
    return %arg0, %c0_i32 : i32, i32
  }
  func.func @transform_1(%arg0: i32) -> (i32, i32) {
    %c0_i32 = arith.constant 0 : i32
    %c0_i32_0 = arith.constant 0 : i32
    %c0_i32_1 = arith.constant 0 : i32
    return %c0_i32, %c0_i32_0 : i32, i32
  }
  func.func @transform_2(%arg0: i32) -> (i32, i32) {
    %c0_i32 = arith.constant 0 : i32
    %c0_i32_0 = arith.constant 0 : i32
    %c0_i32_1 = arith.constant 0 : i32
    return %c0_i32, %c0_i32_0 : i32, i32
  }
  func.func @transform_3(%arg0: i32) -> (i32, i32) {
    %c0_i32 = arith.constant 0 : i32
    %c0_i32_0 = arith.constant 0 : i32
    %c0_i32_1 = arith.constant 0 : i32
    return %c0_i32, %c0_i32_0 : i32, i32
  }
  func.func @transform_4(%arg0: i32) -> (i32, i32) {
    %c0_i32 = arith.constant 0 : i32
    %c0_i32_0 = arith.constant 0 : i32
    %c0_i32_1 = arith.constant 0 : i32
    return %c0_i32, %c0_i32_0 : i32, i32
  }
  func.func @transform_5(%arg0: i32) -> (i32, i32) {
    %c0_i32 = arith.constant 0 : i32
    %c0_i32_0 = arith.constant 0 : i32
    %c0_i32_1 = arith.constant 0 : i32
    return %c0_i32, %c0_i32_0 : i32, i32
  }
  func.func @transform_6(%arg0: i32) -> (i32, i32) {
    %c0_i32 = arith.constant 0 : i32
    %c0_i32_0 = arith.constant 0 : i32
    %c0_i32_1 = arith.constant 0 : i32
    return %c0_i32, %c0_i32_0 : i32, i32
  }
  func.func @transform_7(%arg0: i32) -> (i32, i32) {
    %c0_i32 = arith.constant 0 : i32
    %c0_i32_0 = arith.constant 0 : i32
    return %c0_i32, %arg0 : i32, i32
  }
}

</mosaic_0001>

<llo_original>
// kernel: tpu_custom_call.1
$region0: #{tpu_custom_call.1}
  #allocation0 [shape = 'u32[]', space=smem, size = 0x4, offset = 0x4, fixed_abs, tag = 'smem constant byte address 0x4 - core index']
  #allocation1 [shape = 'u32[144,128]{1,0:T(1,128)}', space=vmem, size = 0x12000, scoped, tag = 'internal scratch']
  %s0 = inlined_call_operand.vmem [shape: bf16[128,18], index: 0, kind: input, shape index: {}]
  %s1 = inlined_call_operand.vmem [shape: bf16[18,128], index: 1, kind: input, shape index: {}]
  %s2 = inlined_call_operand.vmem [shape: f32[1,128], index: 2, kind: input, shape index: {}]
  %s3 = inlined_call_operand.vmem [shape: bf16[128,128], index: 3, kind: input, shape index: {}]
  %s4 = inlined_call_operand.vmem [shape: f32[1,128], index: 4, kind: input, shape index: {}]
  %s5 = inlined_call_operand.vmem [shape: bf16[2,128], index: 5, kind: input, shape index: {}]
  %s6 = inlined_call_operand.vmem [shape: f32[2,1], index: 6, kind: input, shape index: {}]
  %s7 = inlined_call_operand.hbm [shape: f32[2,128], index: 7, kind: output, shape index: {}]
  %s8 = sld [smem:[#allocation0]]
  $region38: #{tpu_custom_call.1} parent=0
    _
  %s10 = ssub.s32 1, %s8
  %s11 = scalar_select 0, %s10, %s8
  $region1: #{tpu_custom_call.1} parent=0
    #allocation2 [shape = 'u8[1024]{0}', space=vmem, size = 0x400, scoped, tag = 'output window, operand 0, single buffered']
    #allocation3 [shape = 's32[1]{0}', space=sflag, size = 0x4, scoped, tag = 'scoped memory for tpu_custom_call.1']
    %12 = vsyncpa [#allocation3], 0
    // Predicated region
    $region2: #{tpu_custom_call.1} parent=1 // pred_check
      _
    $region3: #{tpu_custom_call.1} parent=1 // pred_check_branch
      %14 = sbr.rel (0) target = $region5
    $region4: #{tpu_custom_call.1} parent=1 // pred_region
      _
    $region5: #{tpu_custom_call.1} parent=1 // pred_fallthru
      _
    // Predicated region
    $region6: #{tpu_custom_call.1} parent=1 // pred_check
      _
    $region7: #{tpu_custom_call.1} parent=1 // pred_check_branch
      %16 = sbr.rel (0) target = $region9
    $region8: #{tpu_custom_call.1} parent=1 // pred_region
      _
    $region9: #{tpu_custom_call.1} parent=1 // pred_fallthru
      _
    // Predicated region
    $region10: #{tpu_custom_call.1} parent=1 // pred_check
      _
    $region11: #{tpu_custom_call.1} parent=1 // pred_check_branch
      %18 = sbr.rel (0) target = $region13
    $region12: #{tpu_custom_call.1} parent=1 // pred_region
      _
    $region13: #{tpu_custom_call.1} parent=1 // pred_fallthru
      _
    // Predicated region
    $region14: #{tpu_custom_call.1} parent=1 // pred_check
      _
    $region15: #{tpu_custom_call.1} parent=1 // pred_check_branch
      %20 = sbr.rel (0) target = $region17
    $region16: #{tpu_custom_call.1} parent=1 // pred_region
      _
    $region17: #{tpu_custom_call.1} parent=1 // pred_fallthru
      _
    // Predicated region
    $region18: #{tpu_custom_call.1} parent=1 // pred_check
      _
    $region19: #{tpu_custom_call.1} parent=1 // pred_check_branch
      %22 = sbr.rel (0) target = $region21
    $region20: #{tpu_custom_call.1} parent=1 // pred_region
      _
    $region21: #{tpu_custom_call.1} parent=1 // pred_fallthru
      _
    // Predicated region
    $region22: #{tpu_custom_call.1} parent=1 // pred_check
      _
    $region23: #{tpu_custom_call.1} parent=1 // pred_check_branch
      %24 = sbr.rel (0) target = $region25
    $region24: #{tpu_custom_call.1} parent=1 // pred_region
      _
    $region25: #{tpu_custom_call.1} parent=1 // pred_fallthru
      _
    // Predicated region
    $region26: #{tpu_custom_call.1} parent=1 // pred_check
      _
    $region27: #{tpu_custom_call.1} parent=1 // pred_check_branch
      %26 = sbr.rel (0) target = $region29
    $region28: #{tpu_custom_call.1} parent=1 // pred_region
      _
    $region29: #{tpu_custom_call.1} parent=1 // pred_fallthru
      _
    %v28 = vld [vmem:[%s0] sm:$0xf]
    %v29 = vld [vmem:[%s0 + $0x4] sm:$0xf]
    %v30 = vld [vmem:[%s0 + $0x8] sm:$0xf]
    %v31 = vld [vmem:[%s0 + $0xc] sm:$0xf]
    %v32 = vld [vmem:[%s0 + $0x10] sm:$0xf]
    %v33 = vld [vmem:[%s0 + $0x14] sm:$0xf]
    %v34 = vld [vmem:[%s0 + $0x18] sm:$0xf]
    %v35 = vld [vmem:[%s0 + $0x1c] sm:$0xf]
    %v36 = vld [vmem:[%s0 + $0x20] sm:$0xf]
    %v37 = vld [vmem:[%s0 + $0x24] sm:$0xf]
    %v38 = vld [vmem:[%s0 + $0x28] sm:$0xf]
    %v39 = vld [vmem:[%s0 + $0x2c] sm:$0xf]
    %v40 = vld [vmem:[%s0 + $0x30] sm:$0xf]
    %v41 = vld [vmem:[%s0 + $0x34] sm:$0xf]
    %v42 = vld [vmem:[%s0 + $0x38] sm:$0xf]
    %v43 = vld [vmem:[%s0 + $0x3c] sm:$0xf]
    %v44 = vld [vmem:[%s1] sm:$0xf]
    %v45 = vld [vmem:[%s1 + $0x4] sm:$0xf]
    %v46 = vld [vmem:[%s1 + $0x8] sm:$0x1]
    %v47 = vld [vmem:[%s2] sm:$0x1]
    %v49 = vlaneseq
    %v50 = vshrl.u32 %v49, 7
    %v51 = vsub.s32 0, %v50
    %v52 = vrot.slane %v47, %v51
    %v70 = vunpack.c.l.b16 %v28
    %v71 = vunpack.c.l.b16 %v29
    %v72 = vunpack.c.l.b16 %v30
    %v73 = vunpack.c.l.b16 %v31
    %v74 = vunpack.c.l.b16 %v32
    %v75 = vunpack.c.l.b16 %v33
    %v76 = vunpack.c.l.b16 %v34
    %v77 = vunpack.c.l.b16 %v35
    %v78 = vunpack.c.l.b16 %v36
    %v79 = vunpack.c.l.b16 %v37
    %v80 = vunpack.c.l.b16 %v38
    %v81 = vunpack.c.l.b16 %v39
    %v82 = vunpack.c.l.b16 %v40
    %v83 = vunpack.c.l.b16 %v41
    %v84 = vunpack.c.l.b16 %v42
    %v85 = vunpack.c.l.b16 %v43
    %v86 = vpack.c.b16 %v71, %v70
    %v87 = vpack.c.b16 %v73, %v72
    %v88 = vpack.c.b16 %v75, %v74
    %v89 = vpack.c.b16 %v77, %v76
    %v90 = vpack.c.b16 %v79, %v78
    %v91 = vpack.c.b16 %v81, %v80
    %v92 = vpack.c.b16 %v83, %v82
    %v93 = vpack.c.b16 %v85, %v84
    %v97 = vunpack.c.l.b16 %v44
    %v98 = vunpack.c.l.b16 %v45
    %v99 = vunpack.c.l.b16 %v46
    %v100 = vpack.c.b16 %v98, %v97
    %v101 = vpack.c.b16 %v99, %v99
    %vm103 = vcmask 146432
    %v105 = vsel %vm103, %v86, 0
    %v108 = vsel %vm103, %v87, 0
    %v111 = vsel %vm103, %v88, 0
    %v114 = vsel %vm103, %v89, 0
    %v117 = vsel %vm103, %v90, 0
    %v120 = vsel %vm103, %v91, 0
    %v123 = vsel %vm103, %v92, 0
    %v126 = vsel %vm103, %v93, 0
    %vm128 = vcmask 1040384
    %v130 = vsel %vm128, %v101, 0
    %132 = vmatprep.subr.bf16.mxu0 0
    %133 = vmatpush1.bf16.msra.mxu0 %v100
    %134 = vmatprep.subr.bf16.mxu0 0
    %135 = vmatpush1.bf16.msra.mxu0 %v130
    %136 = vmatprep.subr.bf16.mxu0 0
    %137 = vmatpush1.bf16.msra.mxu0 0
    %138 = vmatprep.subr.bf16.mxu0 0
    %139 = vmatpush1.bf16.msra.mxu0 0
    %140 = vmatprep.subr.bf16.mxu0 0
    %141 = vmatpush1.bf16.msra.mxu0 0
    %142 = vmatprep.subr.bf16.mxu0 0
    %143 = vmatpush1.bf16.msra.mxu0 0
    %144 = vmatprep.subr.bf16.mxu0 0
    %145 = vmatpush1.bf16.msra.mxu0 0
    %146 = vmatprep.subr.bf16.mxu0 0
    %147 = vmatpush1.bf16.msra.mxu0 0
    %148 = vmatprep.subr.bf16.mxu0 0
    %149 = vmatpush1.bf16.msra.mxu0 0
    %150 = vmatprep.subr.bf16.mxu0 0
    %151 = vmatpush1.bf16.msra.mxu0 0
    %152 = vmatprep.subr.bf16.mxu0 0
    %153 = vmatpush1.bf16.msra.mxu0 0
    %154 = vmatprep.subr.bf16.mxu0 0
    %155 = vmatpush1.bf16.msra.mxu0 0
    %156 = vmatprep.subr.bf16.mxu0 0
    %157 = vmatpush1.bf16.msra.mxu0 0
    %158 = vmatprep.subr.bf16.mxu0 0
    %159 = vmatpush1.bf16.msra.mxu0 0
    %160 = vmatprep.subr.bf16.mxu0 0
    %161 = vmatpush1.bf16.msra.mxu0 0
    %162 = vmatprep.subr.bf16.mxu0 0
    %163 = vmatpush1.bf16.msra.mxu0 0
    %164 = vmatprep.mubr.bf16.mxu0 0
    %165 = vmatmul.mubr.bf16.gmra.mrb[0].mxu0 %v105
    %v166 = vpop.f32.mrb[0].mxu0
    %v167 = vadd.f32 %v52, %v166
    %v168 = vpop.f32.mrb[0].mxu0
    %v169 = vpop.f32.mrb[0].mxu0
    %v170 = vadd.f32 %v52, %v169
    %v171 = vpop.f32.mrb[0].mxu0
    %172 = vmatprep.mubr.bf16.mxu0 0
    %173 = vmatmul.mubr.bf16.gmra.mrb[0].mxu0 %v108
    %v174 = vpop.f32.mrb[0].mxu0
    %v175 = vadd.f32 %v52, %v174
    %v176 = vpop.f32.mrb[0].mxu0
    %v177 = vpop.f32.mrb[0].mxu0
    %v178 = vadd.f32 %v52, %v177
    %v179 = vpop.f32.mrb[0].mxu0
    %180 = vmatprep.mubr.bf16.mxu0 0
    %181 = vmatmul.mubr.bf16.gmra.mrb[0].mxu0 %v111
    %v182 = vpop.f32.mrb[0].mxu0
    %v183 = vadd.f32 %v52, %v182
    %v184 = vpop.f32.mrb[0].mxu0
    %v185 = vpop.f32.mrb[0].mxu0
    %v186 = vadd.f32 %v52, %v185
    %v187 = vpop.f32.mrb[0].mxu0
    %188 = vmatprep.mubr.bf16.mxu0 0
    %189 = vmatmul.mubr.bf16.gmra.mrb[0].mxu0 %v114
    %v190 = vpop.f32.mrb[0].mxu0
    %v191 = vadd.f32 %v52, %v190
    %v192 = vpop.f32.mrb[0].mxu0
    %v193 = vpop.f32.mrb[0].mxu0
    %v194 = vadd.f32 %v52, %v193
    %v195 = vpop.f32.mrb[0].mxu0
    %196 = vmatprep.mubr.bf16.mxu0 0
    %197 = vmatmul.mubr.bf16.gmra.mrb[0].mxu0 %v117
    %v198 = vpop.f32.mrb[0].mxu0
    %v199 = vadd.f32 %v52, %v198
    %v200 = vpop.f32.mrb[0].mxu0
    %v201 = vpop.f32.mrb[0].mxu0
    %v202 = vadd.f32 %v52, %v201
    %v203 = vpop.f32.mrb[0].mxu0
    %204 = vmatprep.mubr.bf16.mxu0 0
    %205 = vmatmul.mubr.bf16.gmra.mrb[0].mxu0 %v120
    %v206 = vpop.f32.mrb[0].mxu0
    %v207 = vadd.f32 %v52, %v206
    %v208 = vpop.f32.mrb[0].mxu0
    %v209 = vpop.f32.mrb[0].mxu0
    %v210 = vadd.f32 %v52, %v209
    %v211 = vpop.f32.mrb[0].mxu0
    %212 = vmatprep.mubr.bf16.mxu0 0
    %213 = vmatmul.mubr.bf16.gmra.mrb[0].mxu0 %v123
    %v214 = vpop.f32.mrb[0].mxu0
    %v215 = vadd.f32 %v52, %v214
    %v216 = vpop.f32.mrb[0].mxu0
    %v217 = vpop.f32.mrb[0].mxu0
    %v218 = vadd.f32 %v52, %v217
    %v219 = vpop.f32.mrb[0].mxu0
    %220 = vmatprep.mubr.bf16.mxu0 0
    %221 = vmatmul.mubr.bf16.gmra.mrb[0].mxu0 %v126
    %v222 = vpop.f32.mrb[0].mxu0
    %v223 = vadd.f32 %v52, %v222
    %v224 = vpop.f32.mrb[0].mxu0
    %v225 = vpop.f32.mrb[0].mxu0
    %v226 = vadd.f32 %v52, %v225
    %v227 = vpop.f32.mrb[0].mxu0
    %228 = vdwg.mxu0
    %v229 = vmax.f32 %v167, 0.0
    %v230 = vmax.f32 %v170, 0.0
    %v231 = vmax.f32 %v175, 0.0
    %v232 = vmax.f32 %v178, 0.0
    %v233 = vmax.f32 %v183, 0.0
    %v234 = vmax.f32 %v186, 0.0
    %v235 = vmax.f32 %v191, 0.0
    %v236 = vmax.f32 %v194, 0.0
    %v237 = vmax.f32 %v199, 0.0
    %v238 = vmax.f32 %v202, 0.0
    %v239 = vmax.f32 %v207, 0.0
    %v240 = vmax.f32 %v210, 0.0
    %v241 = vmax.f32 %v215, 0.0
    %v242 = vmax.f32 %v218, 0.0
    %v243 = vmax.f32 %v223, 0.0
    %v244 = vmax.f32 %v226, 0.0
    %v245 = vpack.c.bf16 %v230, %v229
    %v246 = vpack.c.bf16 %v232, %v231
    %v247 = vpack.c.bf16 %v234, %v233
    %v248 = vpack.c.bf16 %v236, %v235
    %v249 = vpack.c.bf16 %v238, %v237
    %v250 = vpack.c.bf16 %v240, %v239
    %v251 = vpack.c.bf16 %v242, %v241
    %v252 = vpack.c.bf16 %v244, %v243
    %v253 = vld [vmem:[%s3] sm:$0xf]
    %v254 = vld [vmem:[%s3 + $0x4] sm:$0xf]
    %v255 = vld [vmem:[%s3 + $0x8] sm:$0xf]
    %v256 = vld [vmem:[%s3 + $0xc] sm:$0xf]
    %v257 = vld [vmem:[%s3 + $0x10] sm:$0xf]
    %v258 = vld [vmem:[%s3 + $0x14] sm:$0xf]
    %v259 = vld [vmem:[%s3 + $0x18] sm:$0xf]
    %v260 = vld [vmem:[%s3 + $0x1c] sm:$0xf]
    %v261 = vld [vmem:[%s3 + $0x20] sm:$0xf]
    %v262 = vld [vmem:[%s3 + $0x24] sm:$0xf]
    %v263 = vld [vmem:[%s3 + $0x28] sm:$0xf]
    %v264 = vld [vmem:[%s3 + $0x2c] sm:$0xf]
    %v265 = vld [vmem:[%s3 + $0x30] sm:$0xf]
    %v266 = vld [vmem:[%s3 + $0x34] sm:$0xf]
    %v267 = vld [vmem:[%s3 + $0x38] sm:$0xf]
    %v268 = vld [vmem:[%s3 + $0x3c] sm:$0xf]
    %v269 = vld [vmem:[%s4] sm:$0x1]
    %v271 = vlaneseq
    %v272 = vshrl.u32 %v271, 7
    %v273 = vsub.s32 0, %v272
    %v274 = vrot.slane %v269, %v273
    %v292 = vunpack.c.l.b16 %v253
    %v293 = vunpack.c.l.b16 %v254
    %v294 = vunpack.c.l.b16 %v255
    %v295 = vunpack.c.l.b16 %v256
    %v296 = vunpack.c.l.b16 %v257
    %v297 = vunpack.c.l.b16 %v258
    %v298 = vunpack.c.l.b16 %v259
    %v299 = vunpack.c.l.b16 %v260
    %v300 = vunpack.c.l.b16 %v261
    %v301 = vunpack.c.l.b16 %v262
    %v302 = vunpack.c.l.b16 %v263
    %v303 = vunpack.c.l.b16 %v264
    %v304 = vunpack.c.l.b16 %v265
    %v305 = vunpack.c.l.b16 %v266
    %v306 = vunpack.c.l.b16 %v267
    %v307 = vunpack.c.l.b16 %v268
    %v308 = vpack.c.b16 %v293, %v292
    %v309 = vpack.c.b16 %v295, %v294
    %v310 = vpack.c.b16 %v297, %v296
    %v311 = vpack.c.b16 %v299, %v298
    %v312 = vpack.c.b16 %v301, %v300
    %v313 = vpack.c.b16 %v303, %v302
    %v314 = vpack.c.b16 %v305, %v304
    %v315 = vpack.c.b16 %v307, %v306
    %324 = vmatprep.subr.bf16.mxu0 0
    %325 = vmatpush1.bf16.msra.mxu0 %v308
    %326 = vmatprep.subr.bf16.mxu0 0
    %327 = vmatpush1.bf16.msra.mxu0 %v309
    %328 = vmatprep.subr.bf16.mxu0 0
    %329 = vmatpush1.bf16.msra.mxu0 %v310
    %330 = vmatprep.subr.bf16.mxu0 0
    %331 = vmatpush1.bf16.msra.mxu0 %v311
    %332 = vmatprep.subr.bf16.mxu0 0
    %333 = vmatpush1.bf16.msra.mxu0 %v312
    %334 = vmatprep.subr.bf16.mxu0 0
    %335 = vmatpush1.bf16.msra.mxu0 %v313
    %336 = vmatprep.subr.bf16.mxu0 0
    %337 = vmatpush1.bf16.msra.mxu0 %v314
    %338 = vmatprep.subr.bf16.mxu0 0
    %339 = vmatpush1.bf16.msra.mxu0 %v315
    %340 = vmatprep.subr.bf16.mxu0 0
    %341 = vmatpush1.bf16.msra.mxu0 0
    %342 = vmatprep.subr.bf16.mxu0 0
    %343 = vmatpush1.bf16.msra.mxu0 0
    %344 = vmatprep.subr.bf16.mxu0 0
    %345 = vmatpush1.bf16.msra.mxu0 0
    %346 = vmatprep.subr.bf16.mxu0 0
    %347 = vmatpush1.bf16.msra.mxu0 0
    %348 = vmatprep.subr.bf16.mxu0 0
    %349 = vmatpush1.bf16.msra.mxu0 0
    %350 = vmatprep.subr.bf16.mxu0 0
    %351 = vmatpush1.bf16.msra.mxu0 0
    %352 = vmatprep.subr.bf16.mxu0 0
    %353 = vmatpush1.bf16.msra.mxu0 0
    %354 = vmatprep.subr.bf16.mxu0 0
    %355 = vmatpush1.bf16.msra.mxu0 0
    %356 = vmatprep.mubr.bf16.mxu0 0
    %357 = vmatmul.mubr.bf16.gmra.mrb[0].mxu0 %v245
    %v358 = vpop.f32.mrb[0].mxu0
    %v359 = vadd.f32 %v274, %v358
    %v360 = vpop.f32.mrb[0].mxu0
    %v361 = vpop.f32.mrb[0].mxu0
    %v362 = vadd.f32 %v274, %v361
    %v363 = vpop.f32.mrb[0].mxu0
    %364 = vmatprep.mubr.bf16.mxu0 0
    %365 = vmatmul.mubr.bf16.gmra.mrb[0].mxu0 %v246
    %v366 = vpop.f32.mrb[0].mxu0
    %v367 = vadd.f32 %v274, %v366
    %v368 = vpop.f32.mrb[0].mxu0
    %v369 = vpop.f32.mrb[0].mxu0
    %v370 = vadd.f32 %v274, %v369
    %v371 = vpop.f32.mrb[0].mxu0
    %372 = vmatprep.mubr.bf16.mxu0 0
    %373 = vmatmul.mubr.bf16.gmra.mrb[0].mxu0 %v247
    %v374 = vpop.f32.mrb[0].mxu0
    %v375 = vadd.f32 %v274, %v374
    %v376 = vpop.f32.mrb[0].mxu0
    %v377 = vpop.f32.mrb[0].mxu0
    %v378 = vadd.f32 %v274, %v377
    %v379 = vpop.f32.mrb[0].mxu0
    %380 = vmatprep.mubr.bf16.mxu0 0
    %381 = vmatmul.mubr.bf16.gmra.mrb[0].mxu0 %v248
    %v382 = vpop.f32.mrb[0].mxu0
    %v383 = vadd.f32 %v274, %v382
    %v384 = vpop.f32.mrb[0].mxu0
    %v385 = vpop.f32.mrb[0].mxu0
    %v386 = vadd.f32 %v274, %v385
    %v387 = vpop.f32.mrb[0].mxu0
    %388 = vmatprep.mubr.bf16.mxu0 0
    %389 = vmatmul.mubr.bf16.gmra.mrb[0].mxu0 %v249
    %v390 = vpop.f32.mrb[0].mxu0
    %v391 = vadd.f32 %v274, %v390
    %v392 = vpop.f32.mrb[0].mxu0
    %v393 = vpop.f32.mrb[0].mxu0
    %v394 = vadd.f32 %v274, %v393
    %v395 = vpop.f32.mrb[0].mxu0
    %396 = vmatprep.mubr.bf16.mxu0 0
    %397 = vmatmul.mubr.bf16.gmra.mrb[0].mxu0 %v250
    %v398 = vpop.f32.mrb[0].mxu0
    %v399 = vadd.f32 %v274, %v398
    %v400 = vpop.f32.mrb[0].mxu0
    %v401 = vpop.f32.mrb[0].mxu0
    %v402 = vadd.f32 %v274, %v401
    %v403 = vpop.f32.mrb[0].mxu0
    %404 = vmatprep.mubr.bf16.mxu0 0
    %405 = vmatmul.mubr.bf16.gmra.mrb[0].mxu0 %v251
    %v406 = vpop.f32.mrb[0].mxu0
    %v407 = vadd.f32 %v274, %v406
    %v408 = vpop.f32.mrb[0].mxu0
    %v409 = vpop.f32.mrb[0].mxu0
    %v410 = vadd.f32 %v274, %v409
    %v411 = vpop.f32.mrb[0].mxu0
    %412 = vmatprep.mubr.bf16.mxu0 0
    %413 = vmatmul.mubr.bf16.gmra.mrb[0].mxu0 %v252
    %v414 = vpop.f32.mrb[0].mxu0
    %v415 = vadd.f32 %v274, %v414
    %v416 = vpop.f32.mrb[0].mxu0
    %v417 = vpop.f32.mrb[0].mxu0
    %v418 = vadd.f32 %v274, %v417
    %v419 = vpop.f32.mrb[0].mxu0
    %420 = vdwg.mxu0
    %v421 = vmax.f32 %v359, 0.0
    %v422 = vmax.f32 %v362, 0.0
    %v423 = vmax.f32 %v367, 0.0
    %v424 = vmax.f32 %v370, 0.0
    %v425 = vmax.f32 %v375, 0.0
    %v426 = vmax.f32 %v378, 0.0
    %v427 = vmax.f32 %v383, 0.0
    %v428 = vmax.f32 %v386, 0.0
    %v429 = vmax.f32 %v391, 0.0
    %v430 = vmax.f32 %v394, 0.0
    %v431 = vmax.f32 %v399, 0.0
    %v432 = vmax.f32 %v402, 0.0
    %v433 = vmax.f32 %v407, 0.0
    %v434 = vmax.f32 %v410, 0.0
    %v435 = vmax.f32 %v415, 0.0
    %v436 = vmax.f32 %v418, 0.0
    %v437 = vld [vmem:[%s5] sm:$0x1]
    %v438 = vpack.c.bf16 %v422, %v421
    %v439 = vpack.c.bf16 %v424, %v423
    %v440 = vpack.c.bf16 %v426, %v425
    %v441 = vpack.c.bf16 %v428, %v427
    %v442 = vpack.c.bf16 %v430, %v429
    %v443 = vpack.c.bf16 %v432, %v431
    %v444 = vpack.c.bf16 %v434, %v433
    %v445 = vpack.c.bf16 %v436, %v435
    %v446 = vld [vmem:[%s6] sm:$0x3]
    %448 = vset.pattern.permute.xlu0 0
    %449 = vperm.xlu0 %448, %v446
    %v450 = vpop.permute.xlu0 %449
    %452 = vmatprep.subr.bf16.mxu0 0
    %453 = vmatpush1.bf16.xpose.msra.mxu0 %v438
    %454 = vmatprep.subr.bf16.mxu0 0
    %455 = vmatpush1.bf16.xpose.msra.mxu0 %v439
    %456 = vmatprep.subr.bf16.mxu0 0
    %457 = vmatpush1.bf16.xpose.msra.mxu0 %v440
    %458 = vmatprep.subr.bf16.mxu0 0
    %459 = vmatpush1.bf16.xpose.msra.mxu0 %v441
    %460 = vmatprep.subr.bf16.mxu0 0
    %461 = vmatpush1.bf16.xpose.msra.mxu0 %v442
    %462 = vmatprep.subr.bf16.mxu0 0
    %463 = vmatpush1.bf16.xpose.msra.mxu0 %v443
    %464 = vmatprep.subr.bf16.mxu0 0
    %465 = vmatpush1.bf16.xpose.msra.mxu0 %v444
    %466 = vmatprep.subr.bf16.mxu0 0
    %467 = vmatpush1.bf16.xpose.msra.mxu0 %v445
    %468 = vmatprep.subr.bf16.mxu0 0
    %469 = vmatpush1.bf16.xpose.msra.mxu0 0
    %470 = vmatprep.subr.bf16.mxu0 0
    %471 = vmatpush1.bf16.xpose.msra.mxu0 0
    %472 = vmatprep.subr.bf16.mxu0 0
    %473 = vmatpush1.bf16.xpose.msra.mxu0 0
    %474 = vmatprep.subr.bf16.mxu0 0
    %475 = vmatpush1.bf16.xpose.msra.mxu0 0
    %476 = vmatprep.subr.bf16.mxu0 0
    %477 = vmatpush1.bf16.xpose.msra.mxu0 0
    %478 = vmatprep.subr.bf16.mxu0 0
    %479 = vmatpush1.bf16.xpose.msra.mxu0 0
    %480 = vmatprep.subr.bf16.mxu0 0
    %481 = vmatpush1.bf16.xpose.msra.mxu0 0
    %482 = vmatprep.subr.bf16.mxu0 0
    %483 = vmatpush1.bf16.xpose.msra.mxu0 0
    %484 = vmatprep.mubr.bf16.mxu0 0
    %485 = vmatmul.mubr.bf16.gmra.mrb[0].mxu0 %v437
    %v486 = vpop.f32.mrb[0].mxu0
    %v487 = vadd.f32 %v450, %v486
    %v488 = vpop.f32.mrb[0].mxu0
    %v489 = vpop.f32.mrb[0].mxu0
    %v490 = vpop.f32.mrb[0].mxu0
    %491 = vdwg.mxu0
    %492 = vst [vmem:[#allocation2] sm:$0x3] %v487
    // Predicated region
    $region30: #{tpu_custom_call.1} parent=1 // pred_check
      _
    $region31: #{tpu_custom_call.1} parent=1 // pred_check_branch
      %494 = sbr.rel (0) target = $region33
    $region32: #{tpu_custom_call.1} parent=1 // pred_region
      %s496 = ssub.s32 32, 32
      %497 = vsyncadd [#allocation3], %s496
      %s499 = sshll.u32 [#allocation2], 4
      %s500 = int_to_ptr.vmem [resolvable:$true] %s499
      %502 = dma.vmem_to_hbm [thread:$0]  %s500, 32, %s7, [#allocation3]
    $region33: #{tpu_custom_call.1} parent=1 // pred_fallthru
      _
    // Predicated region
    $region34: #{tpu_custom_call.1} parent=1 // pred_check
      _
    $region35: #{tpu_custom_call.1} parent=1 // pred_check_branch
      %504 = sbr.rel (0) target = $region37
    $region36: #{tpu_custom_call.1} parent=1 // pred_region
      %505 = dma.done [#allocation3], 32
    $region37: #{tpu_custom_call.1} parent=1 // pred_fallthru
      _
    %506 = vsyncpa [#allocation3], 1

</llo_original>
